<compile_context>
chip_gen: v5e
topology: v5e:2x2
jax: 0.10.0
libtpu: 0.0.40
codegen_flags: <defaults>
</compile_context>

<pallas_src>
import functools

import jax
import jax.numpy as jnp
from jax.experimental import pallas as pl
from jax.experimental.pallas import tpu as pltpu

LANE = 128        # TPU lane width (last dim)
SUBLANE = 8       # f32 sublane width (second-to-last dim); bf16 packs 16
NEG_BIG = -1e30   # pad value for b2 so padded logit columns vanish under softmax


def _pad_to(a, axis, multiple, value=0.0):
    """Pad `a` along `axis` up to a multiple of `multiple` with `value`."""
    size = a.shape[axis]
    pad = (-size) % multiple
    if pad == 0:
        return a
    widths = [(0, 0)] * a.ndim
    widths[axis] = (0, pad)
    return jnp.pad(a, widths, constant_values=value)


def _surname_kernel(x_ref, w1_ref, b1_ref, w2_ref, b2_ref, out_ref, *, apply_softmax):
    # Cast x in-register to the MXU operand dtype (no-op if the wrapper already cast it).
    x = x_ref[...].astype(w1_ref.dtype)

    # fc1 + ReLU: MXU matmul with f32 accumulation, f32 epilogue.
    h = jnp.dot(x, w1_ref[...], preferred_element_type=jnp.float32) + b1_ref[...]
    h = jnp.maximum(h, 0.0)

    # Dropout: inference semantics (identity).
    # TODO(synk): training-mode dropout mask via pltpu.prng_seed/prng_random_bits if needed.

    # fc2: feed the MXU in the weights' dtype, accumulate in f32.
    # Padded logit lanes carry b2 == -1e30 -> exp() == 0 under softmax.
    y = jnp.dot(h.astype(w2_ref.dtype), w2_ref[...],
                preferred_element_type=jnp.float32) + b2_ref[...]

    if apply_softmax:
        # Numerically stable softmax over the class (lane) axis.
        m = jnp.max(y, axis=-1, keepdims=True)
        e = jnp.exp(y - m)
        y = e * pl.reciprocal(jnp.sum(e, axis=-1, keepdims=True), approx=True)

    out_ref[...] = y.astype(out_ref.dtype)


def surname_model_forward(x, w1, b1, w2, b2, apply_softmax=False,
                          compute_dtype=jnp.bfloat16, batch_tile=2048,
                          out_dtype=None):
    """x: [B, input_dim]; w1:[in,hid], b1:[1,hid], w2:[hid,out], b2:[1,out].

    Returns [B, output_dim] logits (or softmax probabilities).
      compute_dtype: MXU operand dtype for x/W1/W2 (bf16 default on all generations).
      batch_tile:    batch tile for the streaming path (sweepable; 2048-4096 recommended,
                     on v7x prefer a size that keeps the grid an even length >= 2).
      out_dtype:     output dtype; defaults to f32 (small path) / bf16 (streaming path).
    """
    B, Din = x.shape
    Dout = w2.shape[1]

    # ---- lane-dense weight/bias padding (layout plumbing, not compute) ----
    w1p = _pad_to(_pad_to(w1, 0, LANE), 1, LANE).astype(compute_dtype)
    b1p = _pad_to(b1, 1, LANE)                                # f32
    w2p = _pad_to(_pad_to(w2, 0, LANE), 1, LANE).astype(compute_dtype)
    b2p = _pad_to(b2, 1, LANE, value=NEG_BIG)                 # f32, -1e30 in padded lanes
    Din_p, H_p = w1p.shape
    Dout_p = w2p.shape[1]

    # x: only touch it in the wrapper if a feature pad is needed anyway (cast fuses with
    # that pass).  Otherwise stream x in its own dtype; the kernel casts in-register.
    if Din % LANE != 0:
        xp = _pad_to(x.astype(compute_dtype), 1, LANE)
    else:
        xp = x

    # Batch padding only to the sublane packing of xp's dtype (never to batch_tile).
    sub = 16 if xp.dtype == jnp.bfloat16 else SUBLANE
    xb = _pad_to(xp, 0, sub)
    Bp = xb.shape[0]

    kernel = functools.partial(_surname_kernel, apply_softmax=apply_softmax)

    if B <= batch_tile:
        # Small problem: no grid, no pipelining machinery -- whole arrays live in VMEM.
        out_dt = jnp.float32 if out_dtype is None else out_dtype
        vmem = pl.BlockSpec(memory_space=pltpu.MemorySpace.VMEM)
        out = pl.pallas_call(
            kernel,
            out_shape=jax.ShapeDtypeStruct((Bp, Dout_p), out_dt),
            in_specs=[vmem, vmem, vmem, vmem, vmem],
            out_specs=vmem,
        )(xb, w1p, b1p, w2p, b2p)
    else:
        # Streaming path: tile over batch only; weights/biases DMA'd once (constant
        # index_map) and VMEM-resident.  Ragged last block handled by Pallas.
        out_dt = jnp.bfloat16 if out_dtype is None else out_dtype
        out = pl.pallas_call(
            kernel,
            out_shape=jax.ShapeDtypeStruct((Bp, Dout_p), out_dt),
            grid=(pl.cdiv(Bp, batch_tile),),
            in_specs=[
                pl.BlockSpec((batch_tile, Din_p), lambda i: (i, 0)),   # x streams
                pl.BlockSpec((Din_p, H_p), lambda i: (0, 0)),          # W1 resident
                pl.BlockSpec((1, H_p), lambda i: (0, 0)),              # b1 resident
                pl.BlockSpec((H_p, Dout_p), lambda i: (0, 0)),         # W2 resident
                pl.BlockSpec((1, Dout_p), lambda i: (0, 0)),           # b2 resident
            ],
            out_specs=pl.BlockSpec((batch_tile, Dout_p), lambda i: (i, 0)),
            compiler_params=pltpu.CompilerParams(
                # Independent batch tiles -> megacore / dual-TC (v7x) sharding.
                dimension_semantics=("parallel",),
                # 32 MiB: raises v5e's 16 MiB scoped default so big tiles keep
                # full double-buffering; within v6e/v7x budgets.
                vmem_limit_bytes=32 * 1024 * 1024),
        )(xb, w1p, b1p, w2p, b2p)

    # Slice off batch padding and padded class lanes.
    return out[:B, :Dout]


def init_params(key, input_dim, hidden_dim, output_dim):
    """Deterministic synthetic parameters (shapes from SurnameModel.__init__)."""
    k1, k2, k3, k4 = jax.random.split(key, 4)
    # Stored pre-transposed relative to torch Linear's (out, in) layout.
    w1 = jax.random.normal(k1, (input_dim, hidden_dim), jnp.float32) * 0.1
    b1 = jax.random.normal(k2, (1, hidden_dim), jnp.float32) * 0.1
    w2 = jax.random.normal(k3, (hidden_dim, output_dim), jnp.float32) * 0.1
    b2 = jax.random.normal(k4, (1, output_dim), jnp.float32) * 0.1
    return w1, b1, w2, b2


def reference_forward(x, w1, b1, w2, b2, apply_softmax=False):
    h = jnp.maximum(x @ w1 + b1, 0.0)
    y = h @ w2 + b2
    if apply_softmax:
        y = jax.nn.softmax(y, axis=1)
    return y


if __name__ == "__main__":
    key = jax.random.PRNGKey(0)
    kx, kp, kb = jax.random.split(key, 3)

    batch, input_dim, hidden_dim, output_dim = 8, 64, 32, 16
    x = jax.random.normal(kx, (batch, input_dim), jnp.float32)
    w1, b1, w2, b2 = init_params(kp, input_dim, hidden_dim, output_dim)
    y_ref = reference_forward(x, w1, b1, w2, b2, apply_softmax=False)
    y_sm_ref = reference_forward(x, w1, b1, w2, b2, apply_softmax=True)

    # --- small batch, f32 MXU operands: grid-free, whole-array-in-VMEM, tight check ---
    y = jax.block_until_ready(
        surname_model_forward(x, w1, b1, w2, b2, apply_softmax=False,
                              compute_dtype=jnp.float32))
    y_sm = jax.block_until_ready(
        surname_model_forward(x, w1, b1, w2, b2, apply_softmax=True,
                              compute_dtype=jnp.float32))
    assert y.shape == (batch, output_dim)
    assert jnp.allclose(y, y_ref, atol=1e-4, rtol=1e-4)
    # approx reciprocal on the softmax denominator -> slightly looser tolerance
    assert jnp.allclose(y_sm, y_sm_ref, atol=5e-3, rtol=5e-3)

    # --- small batch, default bf16 MXU operands ---
    y_bf = jax.block_until_ready(
        surname_model_forward(x, w1, b1, w2, b2, apply_softmax=False))
    assert jnp.allclose(y_bf, y_ref, atol=5e-2, rtol=5e-2)

    # --- larger batch: streaming path, large tile, resident weights, ragged last block,
    #     bf16 MXU inputs and bf16 output stream ---
    big_batch = 4100   # deliberately not a multiple of the tile or sublane
    xb = jax.random.normal(kb, (big_batch, input_dim), jnp.float32)
    yb = jax.block_until_ready(
        surname_model_forward(xb, w1, b1, w2, b2, apply_softmax=True,
                              batch_tile=2048))
    yb_ref = reference_forward(xb, w1, b1, w2, b2, apply_softmax=True)
    assert yb.shape == (big_batch, output_dim)
    assert jnp.allclose(yb, yb_ref, atol=5e-2, rtol=5e-2)

    print("KERNEL_OK")
</pallas_src>

<mosaic_0001>
module attributes {stable_mosaic.version = 11 : i64} {
  func.func @_surname_kernel(%arg0: memref<8x128xf32, #tpu.memory_space<vmem>>, %arg1: memref<128x128xf32, #tpu.memory_space<vmem>>, %arg2: memref<1x128xf32, #tpu.memory_space<vmem>>, %arg3: memref<128x128xf32, #tpu.memory_space<vmem>>, %arg4: memref<1x128xf32, #tpu.memory_space<vmem>>, %arg5: memref<8x128xf32, #tpu.memory_space<vmem>>) attributes {dimension_semantics = [], scalar_prefetch = 0 : i64, scratch_operands = 0 : i64, tpu.core_type = #tpu.core_type<tc>} {
    %c0 = arith.constant 0 : index
    %c0_0 = arith.constant 0 : index
    %0 = vector.load %arg0[%c0, %c0_0] : memref<8x128xf32, #tpu.memory_space<vmem>>, vector<8x128xf32>
    %c0_1 = arith.constant 0 : index
    %c0_2 = arith.constant 0 : index
    %1 = vector.load %arg1[%c0_1, %c0_2] : memref<128x128xf32, #tpu.memory_space<vmem>>, vector<128x128xf32>
    %cst = arith.constant dense<0.000000e+00> : vector<8x128xf32>
    %2 = tpu.matmul %0, %1, %cst {dimension_numbers = #tpu.dot_dimension_numbers<[1], [0], [0], [1], [0, 0, 1, 1], [], []>} : vector<8x128xf32>, vector<128x128xf32>, vector<8x128xf32> -> vector<8x128xf32>
    %c0_3 = arith.constant 0 : index
    %c0_4 = arith.constant 0 : index
    %3 = vector.load %arg2[%c0_3, %c0_4] : memref<1x128xf32, #tpu.memory_space<vmem>>, vector<1x128xf32>
    %4 = vector.broadcast %3 : vector<1x128xf32> to vector<8x128xf32>
    %5 = arith.addf %2, %4 : vector<8x128xf32>
    %cst_5 = arith.constant 0.000000e+00 : f32
    %6 = vector.broadcast %cst_5 : f32 to vector<8x128xf32>
    %7 = arith.maximumf %5, %6 : vector<8x128xf32>
    %c0_6 = arith.constant 0 : index
    %c0_7 = arith.constant 0 : index
    %8 = vector.load %arg3[%c0_6, %c0_7] : memref<128x128xf32, #tpu.memory_space<vmem>>, vector<128x128xf32>
    %cst_8 = arith.constant dense<0.000000e+00> : vector<8x128xf32>
    %9 = tpu.matmul %7, %8, %cst_8 {dimension_numbers = #tpu.dot_dimension_numbers<[1], [0], [0], [1], [0, 0, 1, 1], [], []>} : vector<8x128xf32>, vector<128x128xf32>, vector<8x128xf32> -> vector<8x128xf32>
    %c0_9 = arith.constant 0 : index
    %c0_10 = arith.constant 0 : index
    %10 = vector.load %arg4[%c0_9, %c0_10] : memref<1x128xf32, #tpu.memory_space<vmem>>, vector<1x128xf32>
    %11 = vector.broadcast %10 : vector<1x128xf32> to vector<8x128xf32>
    %12 = arith.addf %9, %11 : vector<8x128xf32>
    %c0_11 = arith.constant 0 : index
    %c0_12 = arith.constant 0 : index
    %13 = vector.load %arg5[%c0_11, %c0_12] : memref<8x128xf32, #tpu.memory_space<vmem>>, vector<8x128xf32>
    tpu.vector_store %arg5[%c0_11, %c0_12], %12 {strides = array<i32>} : memref<8x128xf32, #tpu.memory_space<vmem>>, vector<8x128xf32>,
    return
  }
}

</mosaic_0001>

<llo_original>
// kernel: tpu_custom_call.1
$region0: #{tpu_custom_call.1}
  #allocation0 [shape = 'u32[]', space=smem, size = 0x4, offset = 0x4, fixed_abs, tag = 'smem constant byte address 0x4 - core index']
  #allocation1 [shape = 'u32[72,128]{1,0:T(1,128)}', space=vmem, size = 0x9000, scoped, tag = 'internal scratch']
  %s0 = inlined_call_operand.hbm [shape: f32[8,128], index: 0, kind: input, shape index: {}]
  %s1 = inlined_call_operand.hbm [shape: f32[128,128], index: 1, kind: input, shape index: {}]
  %s2 = inlined_call_operand.vmem [shape: f32[1,128], index: 2, kind: input, shape index: {}]
  %s3 = inlined_call_operand.hbm [shape: f32[128,128], index: 3, kind: input, shape index: {}]
  %s4 = inlined_call_operand.vmem [shape: f32[1,128], index: 4, kind: input, shape index: {}]
  %s5 = inlined_call_operand.hbm [shape: f32[8,128], index: 5, kind: output, shape index: {}]
  %s6 = sld [smem:[#allocation0]]
  $region42: #{tpu_custom_call.1} parent=0
    _
  %s8 = ssub.s32 1, %s6
  %s9 = scalar_select 0, %s8, %s6
  $region1: #{tpu_custom_call.1} parent=0
    #allocation2 [shape = 'u8[4096]{0}', space=vmem, size = 0x1000, scoped, tag = 'input window, operand 0, single buffered']
    #allocation3 [shape = 's32[1]{0}', space=sflag, size = 0x4, scoped, tag = 'scoped memory for tpu_custom_call.1']
    #allocation4 [shape = 's32[1]{0}', space=sflag, size = 0x4, scoped, tag = 'scoped memory for tpu_custom_call.1']
    #allocation5 [shape = 'u8[65536]{0}', space=vmem, size = 0x10000, scoped, tag = 'input window, operand 1, single buffered']
    #allocation6 [shape = 's32[1]{0}', space=sflag, size = 0x4, scoped, tag = 'scoped memory for tpu_custom_call.1']
    #allocation7 [shape = 'u8[65536]{0}', space=vmem, size = 0x10000, scoped, tag = 'input window, operand 3, single buffered']
    #allocation8 [shape = 'u8[4096]{0}', space=vmem, size = 0x1000, scoped, tag = 'output window, operand 0, single buffered']
    %10 = vsyncpa [#allocation3], 0
    %11 = vsyncpa [#allocation6], 0
    %12 = vsyncpa [#allocation4], 0
    // Predicated region
    $region2: #{tpu_custom_call.1} parent=1 // pred_check
      _
    $region3: #{tpu_custom_call.1} parent=1 // pred_check_branch
      %14 = sbr.rel (0) target = $region5
    $region4: #{tpu_custom_call.1} parent=1 // pred_region
      %16 = vsyncadd [#allocation3], 0
      %s18 = sshll.u32 %s0, 4
      %s19 = int_to_ptr.hbm [resolvable:$true] %s18
      %s20 = sshll.u32 [#allocation2], 4
      %s21 = int_to_ptr.vmem [resolvable:$true] %s20
      %23 = dma.hbm_to_vmem [thread:$0]  %s19, 128, %s21, [#allocation3]
    $region5: #{tpu_custom_call.1} parent=1 // pred_fallthru
      _
    // Predicated region
    $region6: #{tpu_custom_call.1} parent=1 // pred_check
      _
    $region7: #{tpu_custom_call.1} parent=1 // pred_check_branch
      %25 = sbr.rel (0) target = $region9
    $region8: #{tpu_custom_call.1} parent=1 // pred_region
      %27 = vsyncadd [#allocation6], 0
      %s28 = sshll.u32 %s1, 4
      %s29 = int_to_ptr.hbm [resolvable:$true] %s28
      %s30 = sshll.u32 [#allocation5], 4
      %s31 = int_to_ptr.vmem [resolvable:$true] %s30
      %36 = dma.hbm_to_vmem [thread:$0]  %s29, 2048, %s31, [#allocation6], 128, 128, 8
    $region9: #{tpu_custom_call.1} parent=1 // pred_fallthru
      _
    // Predicated region
    $region10: #{tpu_custom_call.1} parent=1 // pred_check
      _
    $region11: #{tpu_custom_call.1} parent=1 // pred_check_branch
      %38 = sbr.rel (0) target = $region13
    $region12: #{tpu_custom_call.1} parent=1 // pred_region
      _
    $region13: #{tpu_custom_call.1} parent=1 // pred_fallthru
      _
    // Predicated region
    $region14: #{tpu_custom_call.1} parent=1 // pred_check
      _
    $region15: #{tpu_custom_call.1} parent=1 // pred_check_branch
      %40 = sbr.rel (0) target = $region17
    $region16: #{tpu_custom_call.1} parent=1 // pred_region
      %42 = vsyncadd [#allocation6], 0
      %s43 = sshll.u32 %s3, 4
      %s44 = int_to_ptr.hbm [resolvable:$true] %s43
      %s45 = sshll.u32 [#allocation7], 4
      %s46 = int_to_ptr.vmem [resolvable:$true] %s45
      %51 = dma.hbm_to_vmem [thread:$0]  %s44, 2048, %s46, [#allocation6], 128, 128, 8
    $region17: #{tpu_custom_call.1} parent=1 // pred_fallthru
      _
    // Predicated region
    $region18: #{tpu_custom_call.1} parent=1 // pred_check
      _
    $region19: #{tpu_custom_call.1} parent=1 // pred_check_branch
      %53 = sbr.rel (0) target = $region21
    $region20: #{tpu_custom_call.1} parent=1 // pred_region
      _
    $region21: #{tpu_custom_call.1} parent=1 // pred_fallthru
      _
    // Predicated region
    $region22: #{tpu_custom_call.1} parent=1 // pred_check
      _
    $region23: #{tpu_custom_call.1} parent=1 // pred_check_branch
      %55 = sbr.rel (0) target = $region25
    $region24: #{tpu_custom_call.1} parent=1 // pred_region
      %57 = dma.done [#allocation3], 128
    $region25: #{tpu_custom_call.1} parent=1 // pred_fallthru
      _
    // Predicated region
    $region26: #{tpu_custom_call.1} parent=1 // pred_check
      _
    $region27: #{tpu_custom_call.1} parent=1 // pred_check_branch
      %59 = sbr.rel (0) target = $region29
    $region28: #{tpu_custom_call.1} parent=1 // pred_region
      %61 = dma.done [#allocation6], 2048
    $region29: #{tpu_custom_call.1} parent=1 // pred_fallthru
      _
    // Predicated region
    $region30: #{tpu_custom_call.1} parent=1 // pred_check
      _
    $region31: #{tpu_custom_call.1} parent=1 // pred_check_branch
      %63 = sbr.rel (0) target = $region33
    $region32: #{tpu_custom_call.1} parent=1 // pred_region
      %65 = dma.done [#allocation6], 2048
    $region33: #{tpu_custom_call.1} parent=1 // pred_fallthru
      _
    %v66 = vld [vmem:[#allocation2] sm:$0xff]
    %v67 = vld [vmem:[#allocation5] sm:$0xff]
    %v68 = vld [vmem:[#allocation5 + $0x8] sm:$0xff]
    %v69 = vld [vmem:[#allocation5 + $0x10] sm:$0xff]
    %v70 = vld [vmem:[#allocation5 + $0x18] sm:$0xff]
    %v71 = vld [vmem:[#allocation5 + $0x20] sm:$0xff]
    %v72 = vld [vmem:[#allocation5 + $0x28] sm:$0xff]
    %v73 = vld [vmem:[#allocation5 + $0x30] sm:$0xff]
    %v74 = vld [vmem:[#allocation5 + $0x38] sm:$0xff]
    %v75 = vld [vmem:[#allocation5 + $0x40] sm:$0xff]
    %v76 = vld [vmem:[#allocation5 + $0x48] sm:$0xff]
    %v77 = vld [vmem:[#allocation5 + $0x50] sm:$0xff]
    %v78 = vld [vmem:[#allocation5 + $0x58] sm:$0xff]
    %v79 = vld [vmem:[#allocation5 + $0x60] sm:$0xff]
    %v80 = vld [vmem:[#allocation5 + $0x68] sm:$0xff]
    %v81 = vld [vmem:[#allocation5 + $0x70] sm:$0xff]
    %v82 = vld [vmem:[#allocation5 + $0x78] sm:$0xff]
    %v83 = vld [vmem:[%s2] sm:$0x1]
    %v85 = vperm.slane %v83, 0
    %87 = vmatpush.msra.mxu0 %v82
    %88 = vmatpush.msra.mxu0 %v81
    %89 = vmatpush.msra.mxu0 %v80
    %90 = vmatpush.msra.mxu0 %v79
    %91 = vmatpush.msra.mxu0 %v78
    %92 = vmatpush.msra.mxu0 %v77
    %93 = vmatpush.msra.mxu0 %v76
    %94 = vmatpush.msra.mxu0 %v75
    %95 = vmatpush.msra.mxu0 %v74
    %96 = vmatpush.msra.mxu0 %v73
    %97 = vmatpush.msra.mxu0 %v72
    %98 = vmatpush.msra.mxu0 %v71
    %99 = vmatpush.msra.mxu0 %v70
    %100 = vmatpush.msra.mxu0 %v69
    %101 = vmatpush.msra.mxu0 %v68
    %102 = vmatpush.msra.mxu0 %v67
    %103 = vmatmul.f32.gmra.mxu0 %v66
    %v104 = vpop.f32.mrf.mxu0
    %v105 = vadd.f32 %v85, %v104
    %106 = vdwg.mxu0
    %v107 = vmax.f32 %v105, 0.0
    %v108 = vld [vmem:[#allocation7] sm:$0xff]
    %v109 = vld [vmem:[#allocation7 + $0x8] sm:$0xff]
    %v110 = vld [vmem:[#allocation7 + $0x10] sm:$0xff]
    %v111 = vld [vmem:[#allocation7 + $0x18] sm:$0xff]
    %v112 = vld [vmem:[#allocation7 + $0x20] sm:$0xff]
    %v113 = vld [vmem:[#allocation7 + $0x28] sm:$0xff]
    %v114 = vld [vmem:[#allocation7 + $0x30] sm:$0xff]
    %v115 = vld [vmem:[#allocation7 + $0x38] sm:$0xff]
    %v116 = vld [vmem:[#allocation7 + $0x40] sm:$0xff]
    %v117 = vld [vmem:[#allocation7 + $0x48] sm:$0xff]
    %v118 = vld [vmem:[#allocation7 + $0x50] sm:$0xff]
    %v119 = vld [vmem:[#allocation7 + $0x58] sm:$0xff]
    %v120 = vld [vmem:[#allocation7 + $0x60] sm:$0xff]
    %v121 = vld [vmem:[#allocation7 + $0x68] sm:$0xff]
    %v122 = vld [vmem:[#allocation7 + $0x70] sm:$0xff]
    %v123 = vld [vmem:[#allocation7 + $0x78] sm:$0xff]
    %v124 = vld [vmem:[%s4] sm:$0x1]
    %v126 = vperm.slane %v124, 0
    %128 = vmatpush.msra.mxu0 %v123
    %129 = vmatpush.msra.mxu0 %v122
    %130 = vmatpush.msra.mxu0 %v121
    %131 = vmatpush.msra.mxu0 %v120
    %132 = vmatpush.msra.mxu0 %v119
    %133 = vmatpush.msra.mxu0 %v118
    %134 = vmatpush.msra.mxu0 %v117
    %135 = vmatpush.msra.mxu0 %v116
    %136 = vmatpush.msra.mxu0 %v115
    %137 = vmatpush.msra.mxu0 %v114
    %138 = vmatpush.msra.mxu0 %v113
    %139 = vmatpush.msra.mxu0 %v112
    %140 = vmatpush.msra.mxu0 %v111
    %141 = vmatpush.msra.mxu0 %v110
    %142 = vmatpush.msra.mxu0 %v109
    %143 = vmatpush.msra.mxu0 %v108
    %144 = vmatmul.f32.gmra.mxu0 %v107
    %v145 = vpop.f32.mrf.mxu0
    %v146 = vadd.f32 %v126, %v145
    %147 = vdwg.mxu0
    %148 = vst [vmem:[#allocation8] sm:$0xff] %v146
    // Predicated region
    $region34: #{tpu_custom_call.1} parent=1 // pred_check
      _
    $region35: #{tpu_custom_call.1} parent=1 // pred_check_branch
      %150 = sbr.rel (0) target = $region37
    $region36: #{tpu_custom_call.1} parent=1 // pred_region
      %152 = vsyncadd [#allocation4], 0
      %s154 = sshll.u32 [#allocation8], 4
      %s155 = int_to_ptr.vmem [resolvable:$true] %s154
      %s156 = sshll.u32 %s5, 4
      %s157 = int_to_ptr.hbm [resolvable:$true] %s156
      %159 = dma.vmem_to_hbm [thread:$0]  %s155, 128, %s157, [#allocation4]
    $region37: #{tpu_custom_call.1} parent=1 // pred_fallthru
      _
    // Predicated region
    $region38: #{tpu_custom_call.1} parent=1 // pred_check
      _
    $region39: #{tpu_custom_call.1} parent=1 // pred_check_branch
      %161 = sbr.rel (0) target = $region41
    $region40: #{tpu_custom_call.1} parent=1 // pred_region
      %163 = dma.done [#allocation4], 128
    $region41: #{tpu_custom_call.1} parent=1 // pred_fallthru
      _
    %164 = vsyncpa [#allocation3], 1
    %165 = vsyncpa [#allocation6], 1
    %166 = vsyncpa [#allocation4], 1

</llo_original>
